<compile_context>
chip_gen: v7x
topology: tpu7x:2x2x1
jax: 0.10.0
libtpu: 0.0.40
codegen_flags: <defaults>
</compile_context>

<pallas_src>
import functools

import jax
import jax.numpy as jnp
from jax.experimental import pallas as pl
from jax.experimental.pallas import tpu as pltpu


def _round_up(a: int, m: int) -> int:
    return (a + m - 1) // m * m


def _mlp_kernel(x_ref, p_ref, w2_ref, o_ref):
    # x_ref: (3, TB)                       batch on lanes
    # p_ref: (32, 8) packed params: [w1 (3 cols) | b1 | b2 | w3_col | b3 | pad]
    # w2_ref: (32, 32)
    # o_ref: (1, TB)
    x = x_ref[...]
    p = p_ref[...]
    w1 = p[:, 0:3]                                    # (32, 3)
    b1 = p[:, 3:4]                                    # (32, 1)
    b2 = p[:, 4:5]                                    # (32, 1)
    w3c = p[:, 5:6]                                   # (32, 1)
    b3 = p[0:1, 6:7]                                  # (1, 1)

    # ---- layer 1: K=3 contraction as broadcast FMAs on the VPU (skip the MXU) ----
    # TODO(synk): could use stride-0 broadcast loads (x_ref[pl.ds(f, 32, stride=0), :])
    # to get the sublane broadcast for free at the load.
    h1 = (w1[:, 0:1] * x[0:1, :]
          + w1[:, 1:2] * x[1:2, :]
          + w1[:, 2:3] * x[2:3, :]
          + b1)                                       # (32, TB)
    h1 = jnp.maximum(h1, 0.0)

    # ---- layer 2: 32x32 on the MXU, batch on lanes ----
    h2 = jnp.dot(w2_ref[...], h1, preferred_element_type=jnp.float32) + b2
    h2 = jnp.maximum(h2, 0.0)                         # (32, TB)

    # ---- layer 3: off the MXU -- VPU multiply + sublane (XLU) reduction ----
    z = jnp.sum(w3c * h2, axis=0, keepdims=True) + b3  # (1, TB), lane-dense

    # sigmoid via a single EUP tanh: sigmoid(z) = 0.5 * (tanh(z/2) + 1)
    o_ref[...] = 0.5 * (jnp.tanh(0.5 * z) + 1.0)


@functools.partial(jax.jit, static_argnames=("block_batch", "feature_major"))
def flappy_forward(x, w1, b1, w2, b2, w3, b3, *, block_batch=4096, feature_major=False):
    """Fused flappy MLP forward.

    x: (B, 3) f32 (PyTorch convention), or (3, B) when feature_major=True (preferred
       upstream layout -- skips the wrapper-side transpose pass).
    Weights in PyTorch convention: w_i (out, in), b_i (out,).
    Returns (B, 1) f32 = sigmoid(fc3(relu(fc2(relu(fc1(x)))))).
    """
    assert block_batch % 128 == 0

    if feature_major:
        xt = x.astype(jnp.float32)                    # (3, B): consumed directly, no copy
        B = x.shape[1]
    else:
        B = x.shape[0]
        # Single fused XLA transpose pass; prefer feature_major=True upstream to avoid it.
        xt = x.astype(jnp.float32).T                  # (3, B)

    # Batch tile on the lane axis: as large as block_batch allows, but keep >= 2 grid
    # steps for large B so v7x's two TensorCores are both fed via the "parallel" axis.
    half = _round_up(-(-B // 2), 128)
    tb = max(128, min(block_batch, half))
    b_pad = _round_up(B, tb)
    grid = (b_pad // tb,)

    if b_pad != B:
        # Zero-pad the tail tile (padded lanes are sliced off below; output blocks are
        # disjoint per batch tile, so padding never leaks into real rows).
        xt = jnp.pad(xt, ((0, 0), (0, b_pad - B)))

    # Pack all the tiny parameters (w1, b1, b2, w3^T, b3) into a single (32, 8) operand
    # so the call carries 3 operands instead of 7.
    w1c = w1.astype(jnp.float32)                      # (32, 3)
    b1c = b1.reshape(32, 1).astype(jnp.float32)
    b2c = b2.reshape(32, 1).astype(jnp.float32)
    w3c = w3.reshape(32, 1).astype(jnp.float32)       # (1,32) -> column
    b3c = jnp.broadcast_to(b3.reshape(1, 1).astype(jnp.float32), (32, 1))
    packed = jnp.concatenate(
        [w1c, b1c, b2c, w3c, b3c, jnp.zeros((32, 1), jnp.float32)], axis=1)  # (32, 8)
    w2c = w2.astype(jnp.float32)                      # (32, 32)

    flops = 2 * b_pad * (3 * 32 + 32 * 32 + 32 * 1)
    bytes_accessed = 4 * (b_pad * (3 + 1) + 32 * 8 + 32 * 32)

    out = pl.pallas_call(
        _mlp_kernel,
        out_shape=jax.ShapeDtypeStruct((1, b_pad), jnp.float32),
        grid=grid,
        in_specs=[
            pl.BlockSpec((3, tb), lambda i: (0, i)),      # x tile marches over batch
            pl.BlockSpec((32, 8), lambda i: (0, 0)),      # packed params: constant
            pl.BlockSpec((32, 32), lambda i: (0, 0)),     #   index_map -> VMEM-resident
        ],
        out_specs=pl.BlockSpec((1, tb), lambda i: (0, i)),
        compiler_params=pltpu.CompilerParams(
            dimension_semantics=("parallel",),            # shard batch across TCs (v7x)
        ),
        cost_estimate=pl.CostEstimate(
            flops=flops, transcendentals=b_pad, bytes_accessed=bytes_accessed),
    )(xt, packed, w2c)

    return out[:, :B].T                                   # (B, 1)


def init_params(key):
    """PyTorch nn.Linear default init: U[-1/sqrt(fan_in), +1/sqrt(fan_in)], (out, in) weights."""
    dims = [(3, 32), (32, 32), (32, 1)]
    params = []
    for i, (fan_in, fan_out) in enumerate(dims):
        kw, kb = jax.random.split(jax.random.fold_in(key, i))
        bound = 1.0 / jnp.sqrt(float(fan_in))
        w = jax.random.uniform(kw, (fan_out, fan_in), jnp.float32, -bound, bound)
        b = jax.random.uniform(kb, (fan_out,), jnp.float32, -bound, bound)
        params += [w, b]
    return params


def reference_forward(x, w1, b1, w2, b2, w3, b3):
    h1 = jnp.maximum(x @ w1.T + b1, 0.0)
    h2 = jnp.maximum(h1 @ w2.T + b2, 0.0)
    return jax.nn.sigmoid(h2 @ w3.T + b3)


if __name__ == "__main__":
    key = jax.random.PRNGKey(0)
    kp, kx1, kx2, kx3 = jax.random.split(key, 4)
    params = init_params(kp)

    # NOTE: at tiny batches (B~8, one game state per step) the call is pure launch
    # overhead; the kernel pays off when many flappy states are batched per call.

    # Small batch (tail-only tile, grid=(1,)).
    B_small = 8
    x_small = jax.random.normal(kx1, (B_small, 3), dtype=jnp.float32)
    out_small = jax.block_until_ready(flappy_forward(x_small, *params))
    ref_small = reference_forward(x_small, *params)
    assert out_small.shape == (B_small, 1) and out_small.dtype == jnp.float32
    assert jnp.allclose(out_small, ref_small, atol=1e-5, rtol=1e-5)

    # Medium batch: tb=512, grid=(2,) -> exercises multi-step "parallel" grid + padded tail.
    B_mid = 1000
    x_mid = jax.random.normal(kx2, (B_mid, 3), dtype=jnp.float32)
    out_mid = jax.block_until_ready(flappy_forward(x_mid, *params))
    ref_mid = reference_forward(x_mid, *params)
    assert out_mid.shape == (B_mid, 1) and out_mid.dtype == jnp.float32
    assert jnp.allclose(out_mid, ref_mid, atol=1e-5, rtol=1e-5)

    # Feature-major fast path ((3, B) input): skips the wrapper transpose pass.
    out_fm = jax.block_until_ready(
        flappy_forward(x_mid.T, *params, feature_major=True))
    assert jnp.allclose(out_fm, ref_mid, atol=1e-5, rtol=1e-5)

    # Larger batch: tb=4096, grid=(3,) with padded tail -> exercises the big-tile path.
    B_big = 10000
    x_big = jax.random.normal(kx3, (B_big, 3), dtype=jnp.float32)
    out_big = jax.block_until_ready(flappy_forward(x_big, *params))
    ref_big = reference_forward(x_big, *params)
    assert out_big.shape == (B_big, 1) and out_big.dtype == jnp.float32
    assert jnp.allclose(out_big, ref_big, atol=1e-5, rtol=1e-5)

    print("KERNEL_OK")
</pallas_src>

<mosaic_0001>
module attributes {stable_mosaic.version = 11 : i64} {
  func.func @_mlp_kernel(%arg0: i32, %arg1: memref<3x128xf32, #tpu.memory_space<vmem>>, %arg2: memref<32x8xf32, #tpu.memory_space<vmem>>, %arg3: memref<32x32xf32, #tpu.memory_space<vmem>>, %arg4: memref<1x128xf32, #tpu.memory_space<vmem>>) attributes {dimension_semantics = [#tpu.dimension_semantics<parallel>], iteration_bounds = array<i64: 1>, scalar_prefetch = 0 : i64, scratch_operands = 0 : i64, tpu.core_type = #tpu.core_type<tc>, window_params = [{transform_indices = @transform_0, window_bounds = array<i64: 3, 128>}, {pipeline_mode = #tpu.pipeline_mode<synchronous>, transform_indices = @transform_1, window_bounds = array<i64: 32, 8>}, {pipeline_mode = #tpu.pipeline_mode<synchronous>, transform_indices = @transform_2, window_bounds = array<i64: 32, 32>}, {transform_indices = @transform_3, window_bounds = array<i64: 1, 128>}]} {
    %c0 = arith.constant 0 : index
    %c0_0 = arith.constant 0 : index
    %0 = vector.load %arg1[%c0, %c0_0] : memref<3x128xf32, #tpu.memory_space<vmem>>, vector<3x128xf32>
    %c0_1 = arith.constant 0 : index
    %c0_2 = arith.constant 0 : index
    %1 = vector.load %arg2[%c0_1, %c0_2] : memref<32x8xf32, #tpu.memory_space<vmem>>, vector<32x8xf32>
    %2 = vector.extract_strided_slice %1 {offsets = [0, 0], sizes = [32, 3], strides = [1, 1]} : vector<32x8xf32> to vector<32x3xf32>
    %3 = vector.extract_strided_slice %1 {offsets = [0, 3], sizes = [32, 1], strides = [1, 1]} : vector<32x8xf32> to vector<32x1xf32>
    %4 = vector.extract_strided_slice %1 {offsets = [0, 4], sizes = [32, 1], strides = [1, 1]} : vector<32x8xf32> to vector<32x1xf32>
    %5 = vector.extract_strided_slice %1 {offsets = [0, 5], sizes = [32, 1], strides = [1, 1]} : vector<32x8xf32> to vector<32x1xf32>
    %6 = vector.extract_strided_slice %1 {offsets = [0, 6], sizes = [1, 1], strides = [1, 1]} : vector<32x8xf32> to vector<1x1xf32>
    %7 = vector.extract_strided_slice %2 {offsets = [0, 0], sizes = [32, 1], strides = [1, 1]} : vector<32x3xf32> to vector<32x1xf32>
    %8 = vector.extract_strided_slice %0 {offsets = [0, 0], sizes = [1, 128], strides = [1, 1]} : vector<3x128xf32> to vector<1x128xf32>
    %9 = vector.broadcast %7 : vector<32x1xf32> to vector<32x128xf32>
    %10 = vector.broadcast %8 : vector<1x128xf32> to vector<32x128xf32>
    %11 = arith.mulf %9, %10 : vector<32x128xf32>
    %12 = vector.extract_strided_slice %2 {offsets = [0, 1], sizes = [32, 1], strides = [1, 1]} : vector<32x3xf32> to vector<32x1xf32>
    %13 = vector.extract_strided_slice %0 {offsets = [1, 0], sizes = [1, 128], strides = [1, 1]} : vector<3x128xf32> to vector<1x128xf32>
    %14 = vector.broadcast %12 : vector<32x1xf32> to vector<32x128xf32>
    %15 = vector.broadcast %13 : vector<1x128xf32> to vector<32x128xf32>
    %16 = arith.mulf %14, %15 : vector<32x128xf32>
    %17 = arith.addf %11, %16 : vector<32x128xf32>
    %18 = vector.extract_strided_slice %2 {offsets = [0, 2], sizes = [32, 1], strides = [1, 1]} : vector<32x3xf32> to vector<32x1xf32>
    %19 = vector.extract_strided_slice %0 {offsets = [2, 0], sizes = [1, 128], strides = [1, 1]} : vector<3x128xf32> to vector<1x128xf32>
    %20 = vector.broadcast %18 : vector<32x1xf32> to vector<32x128xf32>
    %21 = vector.broadcast %19 : vector<1x128xf32> to vector<32x128xf32>
    %22 = arith.mulf %20, %21 : vector<32x128xf32>
    %23 = arith.addf %17, %22 : vector<32x128xf32>
    %24 = vector.broadcast %3 : vector<32x1xf32> to vector<32x128xf32>
    %25 = arith.addf %23, %24 : vector<32x128xf32>
    %cst = arith.constant 0.000000e+00 : f32
    %26 = vector.broadcast %cst : f32 to vector<32x128xf32>
    %27 = arith.maximumf %25, %26 : vector<32x128xf32>
    %c0_3 = arith.constant 0 : index
    %c0_4 = arith.constant 0 : index
    %28 = vector.load %arg3[%c0_3, %c0_4] : memref<32x32xf32, #tpu.memory_space<vmem>>, vector<32x32xf32>
    %cst_5 = arith.constant dense<0.000000e+00> : vector<32x128xf32>
    %29 = tpu.matmul %28, %27, %cst_5 {dimension_numbers = #tpu.dot_dimension_numbers<[1], [0], [0], [1], [0, 0, 1, 1], [], []>} : vector<32x32xf32>, vector<32x128xf32>, vector<32x128xf32> -> vector<32x128xf32>
    %30 = vector.broadcast %4 : vector<32x1xf32> to vector<32x128xf32>
    %31 = arith.addf %29, %30 : vector<32x128xf32>
    %cst_6 = arith.constant 0.000000e+00 : f32
    %32 = vector.broadcast %cst_6 : f32 to vector<32x128xf32>
    %33 = arith.maximumf %31, %32 : vector<32x128xf32>
    %34 = vector.broadcast %5 : vector<32x1xf32> to vector<32x128xf32>
    %35 = arith.mulf %34, %33 : vector<32x128xf32>
    %cst_7 = arith.constant dense<0.000000e+00> : vector<128xf32>
    %36 = vector.multi_reduction <add>, %35, %cst_7 [0] : vector<32x128xf32> to vector<128xf32>
    %37 = vector.shape_cast %36 : vector<128xf32> to vector<1x128xf32>
    %38 = vector.broadcast %6 : vector<1x1xf32> to vector<1x128xf32>
    %39 = arith.addf %37, %38 : vector<1x128xf32>
    %cst_8 = arith.constant 5.000000e-01 : f32
    %40 = vector.broadcast %cst_8 : f32 to vector<1x128xf32>
    %41 = arith.mulf %40, %39 : vector<1x128xf32>
    %42 = math.tanh %41 : vector<1x128xf32>
    %cst_9 = arith.constant 1.000000e+00 : f32
    %43 = vector.broadcast %cst_9 : f32 to vector<1x128xf32>
    %44 = arith.addf %42, %43 : vector<1x128xf32>
    %cst_10 = arith.constant 5.000000e-01 : f32
    %45 = vector.broadcast %cst_10 : f32 to vector<1x128xf32>
    %46 = arith.mulf %45, %44 : vector<1x128xf32>
    %c0_11 = arith.constant 0 : index
    %c0_12 = arith.constant 0 : index
    %47 = vector.load %arg4[%c0_11, %c0_12] : memref<1x128xf32, #tpu.memory_space<vmem>>, vector<1x128xf32>
    tpu.vector_store %arg4[%c0_11, %c0_12], %46 {strides = array<i32>} : memref<1x128xf32, #tpu.memory_space<vmem>>, vector<1x128xf32>,
    return
  }
  func.func @transform_0(%arg0: i32) -> (i32, i32) {
    %c0_i32 = arith.constant 0 : i32
    %c0_i32_0 = arith.constant 0 : i32
    return %c0_i32, %arg0 : i32, i32
  }
  func.func @transform_1(%arg0: i32) -> (i32, i32) {
    %c0_i32 = arith.constant 0 : i32
    %c0_i32_0 = arith.constant 0 : i32
    %c0_i32_1 = arith.constant 0 : i32
    return %c0_i32, %c0_i32_0 : i32, i32
  }
  func.func @transform_2(%arg0: i32) -> (i32, i32) {
    %c0_i32 = arith.constant 0 : i32
    %c0_i32_0 = arith.constant 0 : i32
    %c0_i32_1 = arith.constant 0 : i32
    return %c0_i32, %c0_i32_0 : i32, i32
  }
  func.func @transform_3(%arg0: i32) -> (i32, i32) {
    %c0_i32 = arith.constant 0 : i32
    %c0_i32_0 = arith.constant 0 : i32
    return %c0_i32, %arg0 : i32, i32
  }
}

</mosaic_0001>

<llo_original>
// kernel: flappy_forward.1
$region0: #{flappy_forward.1}
  #allocation0 [shape = 'u32[]', space=smem, size = 0x4, offset = 0x4, fixed_abs, tag = 'smem constant byte address 0x4 - core index']
  #allocation1 [shape = 'u32[144,128]{1,0:T(1,128)}', space=vmem, size = 0x12000, scoped, tag = 'internal scratch']
  %s0 = inlined_call_operand.vmem [shape: f32[3,128], index: 0, kind: input, shape index: {}]
  %s1 = inlined_call_operand.vmem [shape: f32[32,8], index: 1, kind: input, shape index: {}]
  %s2 = inlined_call_operand.vmem [shape: f32[32,32], index: 2, kind: input, shape index: {}]
  %s3 = inlined_call_operand.vmem [shape: f32[1,128], index: 3, kind: output, shape index: {}]
  %s4 = sld [smem:[#allocation0]]
  $region22: #{flappy_forward.1} parent=0
    _
  %s6 = ssub.s32 1, %s4
  %s7 = scalar_select 0, %s6, %s4
  // Predicated region
  $region2: #{flappy_forward.1} parent=0 // pred_check
    _
  $region3: #{flappy_forward.1} parent=0 // pred_check_branch
    %9 = sbr.rel (0) target = $region5
  $region4: #{flappy_forward.1} parent=0 // pred_region
    _
  $region5: #{flappy_forward.1} parent=0 // pred_fallthru
    _
  // Predicated region
  $region6: #{flappy_forward.1} parent=0 // pred_check
    _
  $region7: #{flappy_forward.1} parent=0 // pred_check_branch
    %11 = sbr.rel (0) target = $region9
  $region8: #{flappy_forward.1} parent=0 // pred_region
    _
  $region9: #{flappy_forward.1} parent=0 // pred_fallthru
    _
  // Predicated region
  $region10: #{flappy_forward.1} parent=0 // pred_check
    _
  $region11: #{flappy_forward.1} parent=0 // pred_check_branch
    %13 = sbr.rel (0) target = $region13
  $region12: #{flappy_forward.1} parent=0 // pred_region
    _
  $region13: #{flappy_forward.1} parent=0 // pred_fallthru
    _
  %v14 = vld [vmem:[%s0] sm:$0x7]
  %v15 = vld [vmem:[%s1] sm:$0xff]
  %v16 = vld [vmem:[%s1 + $0x8] sm:$0xff]
  %v17 = vld [vmem:[%s1 + $0x10] sm:$0xff]
  %v18 = vld [vmem:[%s1 + $0x18] sm:$0xff]
  %20 = vset.pattern.permute.xlu0 0
  %21 = vperm.xlu0 %20, %v15
  %v22 = vpop.permute.xlu0 %21
  %25 = vset.pattern.permute.xlu0 0
  %26 = vperm.xlu0 %25, %v16
  %v27 = vpop.permute.xlu0 %26
  %30 = vset.pattern.permute.xlu0 0
  %31 = vperm.xlu0 %30, %v17
  %v32 = vpop.permute.xlu0 %31
  %35 = vset.pattern.permute.xlu0 0
  %36 = vperm.xlu0 %35, %v18
  %v37 = vpop.permute.xlu0 %36
  %v39 = vlaneseq
  %v40 = vshrl.u32 %v39, 7
  %v41 = vsub.s32 0, %v40
  %v42 = vrot.slane %v14, %v41
  %v43 = vmul.f32 %v22, %v42
  %v44 = vmul.f32 %v27, %v42
  %v45 = vmul.f32 %v32, %v42
  %v46 = vmul.f32 %v37, %v42
  %47 = vset.pattern.permute.xlu0 1
  %48 = vperm.xlu0 %47, %v15
  %v49 = vpop.permute.xlu0 %48
  %51 = vset.pattern.permute.xlu0 1
  %52 = vperm.xlu0 %51, %v16
  %v53 = vpop.permute.xlu0 %52
  %55 = vset.pattern.permute.xlu0 1
  %56 = vperm.xlu0 %55, %v17
  %v57 = vpop.permute.xlu0 %56
  %59 = vset.pattern.permute.xlu0 1
  %60 = vperm.xlu0 %59, %v18
  %v61 = vpop.permute.xlu0 %60
  %v63 = vlaneseq
  %v64 = vshrl.u32 %v63, 7
  %v65 = vsub.s32 1, %v64
  %v66 = vrot.slane %v14, %v65
  %v67 = vmul.f32 %v49, %v66
  %v68 = vmul.f32 %v53, %v66
  %v69 = vmul.f32 %v57, %v66
  %v70 = vmul.f32 %v61, %v66
  %v71 = vadd.f32 %v43, %v67
  %v72 = vadd.f32 %v44, %v68
  %v73 = vadd.f32 %v45, %v69
  %v74 = vadd.f32 %v46, %v70
  %75 = vset.pattern.permute.xlu0 2
  %76 = vperm.xlu0 %75, %v15
  %v77 = vpop.permute.xlu0 %76
  %79 = vset.pattern.permute.xlu0 2
  %80 = vperm.xlu0 %79, %v16
  %v81 = vpop.permute.xlu0 %80
  %83 = vset.pattern.permute.xlu0 2
  %84 = vperm.xlu0 %83, %v17
  %v85 = vpop.permute.xlu0 %84
  %87 = vset.pattern.permute.xlu0 2
  %88 = vperm.xlu0 %87, %v18
  %v89 = vpop.permute.xlu0 %88
  %v91 = vlaneseq
  %v92 = vshrl.u32 %v91, 7
  %v93 = vsub.s32 2, %v92
  %v94 = vrot.slane %v14, %v93
  %v95 = vmul.f32 %v77, %v94
  %v96 = vmul.f32 %v81, %v94
  %v97 = vmul.f32 %v85, %v94
  %v98 = vmul.f32 %v89, %v94
  %v99 = vadd.f32 %v71, %v95
  %v100 = vadd.f32 %v72, %v96
  %v101 = vadd.f32 %v73, %v97
  %v102 = vadd.f32 %v74, %v98
  %103 = vset.pattern.permute.xlu0 3
  %104 = vperm.xlu0 %103, %v15
  %v105 = vpop.permute.xlu0 %104
  %107 = vset.pattern.permute.xlu0 3
  %108 = vperm.xlu0 %107, %v16
  %v109 = vpop.permute.xlu0 %108
  %111 = vset.pattern.permute.xlu0 3
  %112 = vperm.xlu0 %111, %v17
  %v113 = vpop.permute.xlu0 %112
  %115 = vset.pattern.permute.xlu0 3
  %116 = vperm.xlu0 %115, %v18
  %v117 = vpop.permute.xlu0 %116
  %v119 = vadd.f32 %v99, %v105
  %v120 = vadd.f32 %v100, %v109
  %v121 = vadd.f32 %v101, %v113
  %v122 = vadd.f32 %v102, %v117
  %v123 = vmax.f32 %v119, 0.0
  %v124 = vmax.f32 %v120, 0.0
  %v125 = vmax.f32 %v121, 0.0
  %v126 = vmax.f32 %v122, 0.0
  %v127 = vld [vmem:[%s2] sm:$0xff]
  %v128 = vld [vmem:[%s2 + $0x8] sm:$0xff]
  %v129 = vld [vmem:[%s2 + $0x10] sm:$0xff]
  %v130 = vld [vmem:[%s2 + $0x18] sm:$0xff]
  %131 = vset.pattern.permute.xlu0 4
  %132 = vperm.xlu0 %131, %v15
  %v133 = vpop.permute.xlu0 %132
  %135 = vset.pattern.permute.xlu0 4
  %136 = vperm.xlu0 %135, %v16
  %v137 = vpop.permute.xlu0 %136
  %139 = vset.pattern.permute.xlu0 4
  %140 = vperm.xlu0 %139, %v17
  %v141 = vpop.permute.xlu0 %140
  %143 = vset.pattern.permute.xlu0 4
  %144 = vperm.xlu0 %143, %v18
  %v145 = vpop.permute.xlu0 %144
  %vm147 = vcmask 261120
  %v149 = vsel %vm147, %v127, 0
  %v152 = vsel %vm147, %v128, 0
  %v155 = vsel %vm147, %v129, 0
  %v158 = vsel %vm147, %v130, 0
  %160 = vmatprep.subr.mxu0 0.0
  %161 = vmatpush1.msra.mxu0 %v123
  %162 = vmatprep.subr.mxu0 0.0
  %163 = vmatpush1.msra.mxu0 %v124
  %164 = vmatprep.subr.mxu0 0.0
  %165 = vmatpush1.msra.mxu0 %v125
  %166 = vmatprep.subr.mxu0 0.0
  %167 = vmatpush1.msra.mxu0 %v126
  %168 = vmatprep.subr.mxu0 0.0
  %169 = vmatpush1.msra.mxu0 0.0
  %170 = vmatprep.subr.mxu0 0.0
  %171 = vmatpush1.msra.mxu0 0.0
  %172 = vmatprep.subr.mxu0 0.0
  %173 = vmatpush1.msra.mxu0 0.0
  %174 = vmatprep.subr.mxu0 0.0
  %175 = vmatpush1.msra.mxu0 0.0
  %176 = vmatprep.subr.mxu0 0.0
  %177 = vmatpush1.msra.mxu0 0.0
  %178 = vmatprep.subr.mxu0 0.0
  %179 = vmatpush1.msra.mxu0 0.0
  %180 = vmatprep.subr.mxu0 0.0
  %181 = vmatpush1.msra.mxu0 0.0
  %182 = vmatprep.subr.mxu0 0.0
  %183 = vmatpush1.msra.mxu0 0.0
  %184 = vmatprep.subr.mxu0 0.0
  %185 = vmatpush1.msra.mxu0 0.0
  %186 = vmatprep.subr.mxu0 0.0
  %187 = vmatpush1.msra.mxu0 0.0
  %188 = vmatprep.subr.mxu0 0.0
  %189 = vmatpush1.msra.mxu0 0.0
  %190 = vmatprep.subr.mxu0 0.0
  %191 = vmatpush1.msra.mxu0 0.0
  %192 = vmatprep.subr.mxu0 0.0
  %193 = vmatpush1.msra.mxu0 0.0
  %194 = vmatprep.subr.mxu0 0.0
  %195 = vmatpush1.msra.mxu0 0.0
  %196 = vmatprep.subr.mxu0 0.0
  %197 = vmatpush1.msra.mxu0 0.0
  %198 = vmatprep.subr.mxu0 0.0
  %199 = vmatpush1.msra.mxu0 0.0
  %200 = vmatprep.subr.mxu0 0.0
  %201 = vmatpush1.msra.mxu0 0.0
  %202 = vmatprep.subr.mxu0 0.0
  %203 = vmatpush1.msra.mxu0 0.0
  %204 = vmatprep.subr.mxu0 0.0
  %205 = vmatpush1.msra.mxu0 0.0
  %206 = vmatprep.subr.mxu0 0.0
  %207 = vmatpush1.msra.mxu0 0.0
  %208 = vmatprep.subr.mxu0 0.0
  %209 = vmatpush1.msra.mxu0 0.0
  %210 = vmatprep.subr.mxu0 0.0
  %211 = vmatpush1.msra.mxu0 0.0
  %212 = vmatprep.subr.mxu0 0.0
  %213 = vmatpush1.msra.mxu0 0.0
  %214 = vmatprep.subr.mxu0 0.0
  %215 = vmatpush1.msra.mxu0 0.0
  %216 = vmatprep.subr.mxu0 0.0
  %217 = vmatpush1.msra.mxu0 0.0
  %218 = vmatprep.subr.mxu0 0.0
  %219 = vmatpush1.msra.mxu0 0.0
  %220 = vmatprep.subr.mxu0 0.0
  %221 = vmatpush1.msra.mxu0 0.0
  %222 = vmatprep.subr.mxu0 0.0
  %223 = vmatpush1.msra.mxu0 0.0
  %224 = vmatprep.mubr.f32.mxu0 0.0
  %225 = vmatmul.mubr.f32.gmra.mrb[0].mxu0 %v149
  %v226 = vpop.f32.mrb[0].mxu0
  %v227 = vadd.f32 %v133, %v226
  %v228 = vpop.f32.mrb[0].mxu0
  %229 = vmatprep.mubr.f32.mxu0 0.0
  %230 = vmatmul.mubr.f32.gmra.mrb[0].mxu0 %v152
  %v231 = vpop.f32.mrb[0].mxu0
  %v232 = vadd.f32 %v137, %v231
  %v233 = vpop.f32.mrb[0].mxu0
  %234 = vmatprep.mubr.f32.mxu0 0.0
  %235 = vmatmul.mubr.f32.gmra.mrb[0].mxu0 %v155
  %v236 = vpop.f32.mrb[0].mxu0
  %v237 = vadd.f32 %v141, %v236
  %v238 = vpop.f32.mrb[0].mxu0
  %239 = vmatprep.mubr.f32.mxu0 0.0
  %240 = vmatmul.mubr.f32.gmra.mrb[0].mxu0 %v158
  %v241 = vpop.f32.mrb[0].mxu0
  %v242 = vadd.f32 %v145, %v241
  %v243 = vpop.f32.mrb[0].mxu0
  %244 = vdwg.mxu0
  %v245 = vmax.f32 %v227, 0.0
  %v246 = vmax.f32 %v232, 0.0
  %v247 = vmax.f32 %v237, 0.0
  %v248 = vmax.f32 %v242, 0.0
  %249 = vset.pattern.permute.xlu0 5
  %250 = vperm.xlu0 %249, %v15
  %v251 = vpop.permute.xlu0 %250
  %253 = vset.pattern.permute.xlu0 5
  %254 = vperm.xlu0 %253, %v16
  %v255 = vpop.permute.xlu0 %254
  %257 = vset.pattern.permute.xlu0 5
  %258 = vperm.xlu0 %257, %v17
  %v259 = vpop.permute.xlu0 %258
  %261 = vset.pattern.permute.xlu0 5
  %262 = vperm.xlu0 %261, %v18
  %v263 = vpop.permute.xlu0 %262
  %v265 = vmul.f32 %v251, %v245
  %v266 = vmul.f32 %v255, %v246
  %v267 = vmul.f32 %v259, %v247
  %v268 = vmul.f32 %v263, %v248
  %v269 = vadd.f32 %v265, %v266
  %v270 = vadd.f32 %v269, %v267
  %v271 = vadd.f32 %v270, %v268
  %v272 = vrot.slane %v271, 4
  %v273 = vadd.f32 %v271, %v272
  %v274 = vrot.slane %v273, 2
  %v275 = vadd.f32 %v273, %v274
  %v276 = vrot.slane %v275, 1
  %v277 = vadd.f32 %v275, %v276
  %278 = vset.pattern.permute.xlu0 6
  %279 = vperm.xlu0 %278, %v15
  %v280 = vpop.permute.xlu0 %279
  %v282 = vadd.f32 %v277, %v280
  %v283 = vmul.f32 %v282, 0.5
  %v284 = vtanh.pop %v283
  %v285 = vadd.f32 %v284, 1.0
  %v286 = vmul.f32 %v285, 0.5
  %287 = vst [vmem:[%s3] sm:$0x1] %v286
  // Predicated region
  $region14: #{flappy_forward.1} parent=0 // pred_check
    _
  $region15: #{flappy_forward.1} parent=0 // pred_check_branch
    %289 = sbr.rel (0) target = $region17
  $region16: #{flappy_forward.1} parent=0 // pred_region
    _
  $region17: #{flappy_forward.1} parent=0 // pred_fallthru
    _
  // Predicated region
  $region18: #{flappy_forward.1} parent=0 // pred_check
    _
  $region19: #{flappy_forward.1} parent=0 // pred_check_branch
    %291 = sbr.rel (0) target = $region21
  $region20: #{flappy_forward.1} parent=0 // pred_region
    _
  $region21: #{flappy_forward.1} parent=0 // pred_fallthru
    _

</llo_original>
